<compile_context>
chip_gen: v7x
topology: tpu7x:2x2x1
jax: 0.10.0
libtpu: 0.0.40
codegen_flags: <defaults>
</compile_context>

<pallas_src>
import functools

import jax
import jax.numpy as jnp
from jax import lax
from jax.experimental import pallas as pl
from jax.experimental.pallas import tpu as pltpu


_NEG_BIG = -1e30  # finite "-inf": exp underflows to 0, no inf/NaN arithmetic


def _round_up(x, m):
    return ((x + m - 1) // m) * m


def _pad_rows(x, rows, fill=0):
    b = x.shape[0]
    if rows == b:
        return x
    pad = [(0, rows - b)] + [(0, 0)] * (x.ndim - 1)
    return jnp.pad(x, pad, constant_values=fill)


def _vmem_budget_bytes():
    # Generation-aware cap with headroom below physical VMEM
    # (v7x: 64 MiB/TC, v5e/v6e: 128 MiB). Fall back to a v7x-safe figure.
    try:
        info = pltpu.get_tpu_info()
        phys = int(getattr(info, "vmem_capacity_bytes", 64 * 1024 * 1024))
    except Exception:  # pragma: no cover - conservative fallback
        phys = 64 * 1024 * 1024
    return int(phys * 0.65)


# ----------------------------------------------------------------------------
# Kernel 1: cross-entropy, tiled over row blocks. Emits per-row (lse - picked).
# ----------------------------------------------------------------------------
def _cross_entropy_kernel(logits_ref, labels_ref, out_ref):
    x = logits_ref[...].astype(jnp.float32)                       # [bm, C]
    m = jnp.max(x, axis=1, keepdims=True)
    lse = jnp.log(jnp.sum(jnp.exp(x - m), axis=1, keepdims=True)) + m
    col_ids = lax.broadcasted_iota(jnp.int32, x.shape, 1)
    picked = jnp.sum(jnp.where(col_ids == labels_ref[...], x, 0.0),
                     axis=1, keepdims=True)                       # no one_hot f32
    out_ref[...] = lse - picked


def cross_entropy_pallas(logits, labels, *, block=256):
    B, C = logits.shape
    isz = jnp.dtype(logits.dtype).itemsize
    budget = _vmem_budget_bytes()

    def est(rows):
        # double-buffered (rows, C) input + f32 cast/exp/iota working copies
        return 2 * rows * C * isz + 3 * rows * C * 4 + 8 * rows * 512

    bm = min(_round_up(block, 8), _round_up(B, 8))
    while bm > 8 and est(bm) > budget:
        bm = max(8, _round_up(bm // 2, 8))
    # TODO(synk): for vocabulary-scale C where even bm=8 overflows VMEM, tile C
    # with an online logsumexp instead of keeping the class dim whole.

    Bp = _round_up(B, bm)
    logits_p = _pad_rows(logits, Bp)
    labels_p = _pad_rows(labels.astype(jnp.int32), Bp).reshape(Bp, 1)

    vmem_limit = int(min(budget, max(2 * est(bm), 32 * 1024 * 1024)))

    out = pl.pallas_call(
        _cross_entropy_kernel,
        out_shape=jax.ShapeDtypeStruct((Bp, 1), jnp.float32),
        grid_spec=pltpu.PrefetchScalarGridSpec(
            num_scalar_prefetch=0,
            grid=(Bp // bm,),
            in_specs=[pl.BlockSpec((bm, C), lambda i: (i, 0)),
                      pl.BlockSpec((bm, 1), lambda i: (i, 0))],
            out_specs=pl.BlockSpec((bm, 1), lambda i: (i, 0))),
        compiler_params=pltpu.CompilerParams(
            dimension_semantics=("parallel",),
            vmem_limit_bytes=vmem_limit),
        cost_estimate=pl.CostEstimate(
            flops=int(5 * Bp * C),
            transcendentals=int(Bp * C + Bp),
            bytes_accessed=int(Bp * C * isz + Bp * 12)),
    )(logits_p, labels_p)
    return jnp.mean(out[:B, 0])


# ----------------------------------------------------------------------------
# Kernel 2: DebiasSupConLossUni — tiled gram + online masked softmax.
# ----------------------------------------------------------------------------
def _supcon_kernel(f_row_ref, f_col_ref, lab_r_ref, lab_c_ref,
                   bias_r_ref, bias_c_ref, out_ref,
                   frow_sc, m_sc, l_sc, num_sc, cnt_sc,
                   *, inv_temperature, batch, num_pad_cols):
    i = pl.program_id(0)
    k = pl.program_id(1)
    nk = pl.num_programs(1)

    @pl.when(k == 0)
    def _init():
        # Temperature folded into the resident row tile ONCE per row block and
        # reused for the whole k sweep. (For bf16 features this is one extra
        # bf16 rounding vs. dividing the f32 gram — negligible vs. tolerance.)
        fr = f_row_ref[...]
        frow_sc[...] = fr * jnp.asarray(inv_temperature, dtype=fr.dtype)
        m_sc[...] = jnp.full(m_sc.shape, _NEG_BIG, jnp.float32)
        l_sc[...] = jnp.zeros(l_sc.shape, jnp.float32)
        num_sc[...] = jnp.zeros(num_sc.shape, jnp.float32)
        cnt_sc[...] = jnp.zeros(cnt_sc.shape, jnp.float32)

    # A @ B.T via contraction on the trailing feature dim; MXU runs in the
    # native feature dtype with f32 accumulation.
    adc = lax.dot_general(frow_sc[...], f_col_ref[...],
                          (((1,), (1,)), ((), ())),
                          preferred_element_type=jnp.float32)      # [bm, bn]
    bm, bn = adc.shape

    # Positive-pair mask. The diagonal drops out automatically
    # (bias[i] != bias[i] is False) and padded columns drop out because their
    # label fill (-1) never matches a real (>= 0) label, so no iota / offdiag /
    # padding terms are needed here.
    pos = ((lab_r_ref[...] == lab_c_ref[...])
           & (bias_r_ref[...] != bias_c_ref[...]))
    cnt_sc[...] += jnp.sum(pos.astype(jnp.float32), axis=1, keepdims=True)
    num_sc[...] += jnp.sum(jnp.where(pos, adc, 0.0), axis=1, keepdims=True)

    # Online softmax denominator. The diagonal is included here (so the running
    # max matches the reference's full-row max) and its exp contribution is
    # subtracted afterwards, only on diagonal tiles.
    if num_pad_cols > 0:                       # static: only when B % blk != 0
        col_ok = (k * bn + lax.broadcasted_iota(jnp.int32, (1, bn), 1)) < batch
        adc_m = jnp.where(col_ok, adc, _NEG_BIG)
    else:
        adc_m = adc
    m_prev = m_sc[...]
    m_new = jnp.maximum(m_prev, jnp.max(adc_m, axis=1, keepdims=True))
    p = jnp.exp(adc_m - m_new)                 # masked entries underflow to 0
    l_sc[...] = l_sc[...] * jnp.exp(m_prev - m_new) + jnp.sum(
        p, axis=1, keepdims=True)
    m_sc[...] = m_new

    @pl.when(i == k)
    def _drop_diagonal():                      # iota/select only on diag tiles
        r = lax.broadcasted_iota(jnp.int32, (bm, bn), 0)
        c = lax.broadcasted_iota(jnp.int32, (bm, bn), 1)
        l_sc[...] = l_sc[...] - jnp.sum(jnp.where(r == c, p, 0.0),
                                        axis=1, keepdims=True)

    @pl.when(k == nk - 1)
    def _finalize():
        cnt = cnt_sc[...]
        denom = jnp.where(cnt == 0.0, 1.0, cnt)          # sum_mask[sum_mask==0]=1
        log_denom = m_sc[...] + jnp.log(l_sc[...] + 1e-9)
        # mean_log_prob_pos per row (sign flip + batch mean in the wrapper)
        out_ref[...] = (num_sc[...] - cnt * log_denom) / denom


def _supcon_vmem_est(blk, d, isz):
    feat = 4 * blk * d * isz          # double-buffered row + col feature tiles
    scratch = blk * d * isz           # temperature-scaled row copy
    gram = 8 * blk * blk * 4          # adc / masked adc / exp / mask temporaries
    vecs = 16 * blk * 128 * 4         # label/bias tiles, accumulators, output
    return feat + scratch + gram + vecs


def _pick_supcon_block(B, D, isz, budget, requested=None):
    if requested is not None:
        blk = max(128, _round_up(int(requested), 128))
        return min(blk, _round_up(B, 128))
    best, best_bp = 128, _round_up(B, 128)
    for cand in (128, 256, 384, 512):
        if cand > _round_up(B, 128):
            break
        if _supcon_vmem_est(cand, D, isz) > budget:
            continue
        bp = _round_up(B, cand)
        if bp < best_bp or (bp == best_bp and cand > best):
            best, best_bp = cand, bp
    return best


def supcon_pallas(features, labels, biases, temperature, *, block=None):
    B, D = features.shape
    isz = jnp.dtype(features.dtype).itemsize
    budget = _vmem_budget_bytes()
    blk = _pick_supcon_block(B, D, isz, budget, requested=block)
    Bp = _round_up(B, blk)
    gr = Bp // blk
    num_pad = Bp - B

    f_p = _pad_rows(features, Bp)                         # native dtype, no cast
    lab = _pad_rows(labels.astype(jnp.int32), Bp, fill=-1)   # -1 never matches
    bia = _pad_rows(biases.astype(jnp.int32), Bp, fill=-1)
    lab_r, lab_c = lab.reshape(Bp, 1), lab.reshape(1, Bp)
    bia_r, bia_c = bia.reshape(Bp, 1), bia.reshape(1, Bp)

    est = _supcon_vmem_est(blk, D, isz)
    vmem_limit = int(min(budget, max(2 * est, 32 * 1024 * 1024)))

    kernel = functools.partial(_supcon_kernel,
                               inv_temperature=float(1.0 / temperature),
                               batch=B, num_pad_cols=num_pad)
    out = pl.pallas_call(
        kernel,
        out_shape=jax.ShapeDtypeStruct((Bp, 1), jnp.float32),
        grid_spec=pltpu.PrefetchScalarGridSpec(
            num_scalar_prefetch=0,
            grid=(gr, gr),
            in_specs=[
                pl.BlockSpec((blk, D), lambda i, k: (i, 0)),   # row features
                pl.BlockSpec((blk, D), lambda i, k: (k, 0)),   # col features
                pl.BlockSpec((blk, 1), lambda i, k: (i, 0)),   # labels (rows)
                pl.BlockSpec((1, blk), lambda i, k: (0, k)),   # labels (cols)
                pl.BlockSpec((blk, 1), lambda i, k: (i, 0)),   # biases (rows)
                pl.BlockSpec((1, blk), lambda i, k: (0, k)),   # biases (cols)
            ],
            out_specs=pl.BlockSpec((blk, 1), lambda i, k: (i, 0)),
            scratch_shapes=[pltpu.VMEM((blk, D), features.dtype),
                            pltpu.VMEM((blk, 1), jnp.float32),
                            pltpu.VMEM((blk, 1), jnp.float32),
                            pltpu.VMEM((blk, 1), jnp.float32),
                            pltpu.VMEM((blk, 1), jnp.float32)]),
        compiler_params=pltpu.CompilerParams(
            dimension_semantics=("parallel", "arbitrary"),
            vmem_limit_bytes=vmem_limit),
        cost_estimate=pl.CostEstimate(
            flops=int(2 * Bp * Bp * D + 8 * Bp * Bp),
            transcendentals=int(Bp * Bp + 2 * Bp),
            bytes_accessed=int((gr + 1) * Bp * D * isz + 12 * Bp * 4)),
    )(f_p, f_p, lab_r, lab_c, bia_r, bia_c)
    return -jnp.mean(out[:B, 0])


# ----------------------------------------------------------------------------
# Module forward
# ----------------------------------------------------------------------------
def bias_contrastive_loss_uni(logits, labels, biases, features,
                              confusion_matrix, *, weight=0.01,
                              temperature=0.07, bb=0, min_prob=1e-9,
                              ce_block=256, supcon_block=None):
    """Forward of BiasContrastiveLossUni: returns (label_loss, bias_loss)."""
    del weight  # stored by the torch module; unused in the forward pass
    if bb:
        # prior gather + log correction: tiny glue, no tiled hot path -> JAX
        prior = confusion_matrix[biases]                           # [B, C]
        logits = logits + jnp.log(prior + min_prob)
    label_loss = cross_entropy_pallas(logits, labels, block=ce_block)
    bias_loss = supcon_pallas(features, labels, biases, temperature,
                              block=supcon_block)
    return label_loss, bias_loss


# ----------------------------------------------------------------------------
# Pure-JAX reference (mirrors the PyTorch module) for validation.
# ----------------------------------------------------------------------------
def _reference(logits, labels, biases, features, confusion_matrix,
               temperature=0.07, bb=0, min_prob=1e-9):
    if bb:
        logits = logits + jnp.log(confusion_matrix[biases] + min_prob)
    lse = jax.nn.logsumexp(logits, axis=1)
    picked = jnp.take_along_axis(logits, labels[:, None], axis=1)[:, 0]
    label_loss = jnp.mean(lse - picked)

    B = features.shape[0]
    l = labels.reshape(-1, 1)
    b = biases.reshape(-1, 1)
    mask = ((l == l.T) & (b != b.T)).astype(jnp.float32)
    adc = (features.astype(jnp.float32) @ features.astype(jnp.float32).T) / temperature
    logits_c = adc - jnp.max(adc, axis=1, keepdims=True)
    logits_mask = 1.0 - jnp.eye(B, dtype=jnp.float32)
    mask = mask * logits_mask
    exp_logits = jnp.exp(logits_c) * logits_mask
    log_prob = logits_c - jnp.log(exp_logits.sum(1, keepdims=True) + 1e-9)
    sum_mask = mask.sum(1)
    sum_mask = jnp.where(sum_mask == 0, 1.0, sum_mask)
    mean_log_prob_pos = (mask * log_prob).sum(1) / sum_mask
    bias_loss = jnp.mean(-mean_log_prob_pos)
    return label_loss, bias_loss


if __name__ == "__main__":
    base_key = jax.random.PRNGKey(0)

    def run_case(tag, key, B, D, C, NB, bb, supcon_block, ce_block=128):
        k1, k2, k3, k4, k5 = jax.random.split(key, 5)
        logits = jax.random.normal(k1, (B, C), dtype=jnp.float32)
        labels = jax.random.randint(k2, (B,), 0, C, dtype=jnp.int32)
        biases = jax.random.randint(k3, (B,), 0, NB, dtype=jnp.int32)
        features = jax.random.normal(k4, (B, D), dtype=jnp.float32)
        features = features / jnp.linalg.norm(features, axis=1, keepdims=True)
        confusion = jax.nn.softmax(jax.random.normal(k5, (NB, C)), axis=-1)

        label_loss, bias_loss = bias_contrastive_loss_uni(
            logits, labels, biases, features, confusion,
            temperature=0.07, bb=bb, supcon_block=supcon_block,
            ce_block=ce_block)
        jax.block_until_ready((label_loss, bias_loss))

        ref_label, ref_bias = _reference(logits, labels, biases, features,
                                         confusion, temperature=0.07, bb=bb)
        assert jnp.allclose(label_loss, ref_label, rtol=1e-3, atol=1e-3), \
            (tag, label_loss, ref_label)
        assert jnp.allclose(bias_loss, ref_bias, rtol=1e-3, atol=1e-3), \
            (tag, bias_loss, ref_bias)

    # Small case: bb prior-correction branch, single heavily padded tile.
    run_case("small", jax.random.fold_in(base_key, 0),
             B=8, D=32, C=4, NB=2, bb=1, supcon_block=128)
    # Tiled case: B=300 with blk=128 -> 3x3 grid, multi-block online softmax,
    # diagonal handling only on diagonal tiles, padded tail columns.
    run_case("tiled", jax.random.fold_in(base_key, 1),
             B=300, D=64, C=10, NB=3, bb=0, supcon_block=128)
    # Auto-sized case: B=384 -> block auto-selects 384 (no-padding fast path).
    run_case("auto", jax.random.fold_in(base_key, 2),
             B=384, D=128, C=16, NB=2, bb=0, supcon_block=None, ce_block=256)

    print("KERNEL_OK")
</pallas_src>

<mosaic_0001>
module attributes {stable_mosaic.version = 11 : i64} {
  func.func @_cross_entropy_kernel(%arg0: i32, %arg1: memref<8x4xf32, #tpu.memory_space<vmem>>, %arg2: memref<8x1xi32, #tpu.memory_space<vmem>>, %arg3: memref<8x1xf32, #tpu.memory_space<vmem>>) attributes {dimension_semantics = [#tpu.dimension_semantics<parallel>], iteration_bounds = array<i64: 1>, scalar_prefetch = 0 : i64, scratch_operands = 0 : i64, tpu.core_type = #tpu.core_type<tc>, window_params = [{transform_indices = @transform_0, window_bounds = array<i64: 8, 4>}, {transform_indices = @transform_1, window_bounds = array<i64: 8, 1>}, {transform_indices = @transform_2, window_bounds = array<i64: 8, 1>}]} {
    %c0 = arith.constant 0 : index
    %c0_0 = arith.constant 0 : index
    %0 = vector.load %arg1[%c0, %c0_0] : memref<8x4xf32, #tpu.memory_space<vmem>>, vector<8x4xf32>
    %cst = arith.constant dense<0xFF800000> : vector<8xf32>
    %1 = vector.multi_reduction <maximumf>, %0, %cst [1] : vector<8x4xf32> to vector<8xf32>
    %2 = vector.shape_cast %1 : vector<8xf32> to vector<8x1xf32>
    %3 = vector.broadcast %2 : vector<8x1xf32> to vector<8x4xf32>
    %4 = arith.subf %0, %3 : vector<8x4xf32>
    %5 = math.exp %4 : vector<8x4xf32>
    %cst_1 = arith.constant dense<0.000000e+00> : vector<8xf32>
    %6 = vector.multi_reduction <add>, %5, %cst_1 [1] : vector<8x4xf32> to vector<8xf32>
    %7 = vector.shape_cast %6 : vector<8xf32> to vector<8x1xf32>
    %8 = math.log %7 : vector<8x1xf32>
    %9 = arith.addf %8, %2 : vector<8x1xf32>
    %10 = tpu.iota {dimensions = array<i32: 1>} : vector<8x4xi32>
    %c0_2 = arith.constant 0 : index
    %c0_3 = arith.constant 0 : index
    %11 = vector.load %arg2[%c0_2, %c0_3] : memref<8x1xi32, #tpu.memory_space<vmem>>, vector<8x1xi32>
    %12 = vector.broadcast %11 : vector<8x1xi32> to vector<8x4xi32>
    %13 = arith.cmpi eq, %10, %12 : vector<8x4xi32>
    %cst_4 = arith.constant 0.000000e+00 : f32
    %14 = vector.broadcast %cst_4 : f32 to vector<8x4xf32>
    %15 = arith.select %13, %0, %14 : vector<8x4xi1>, vector<8x4xf32>
    %cst_5 = arith.constant dense<0.000000e+00> : vector<8xf32>
    %16 = vector.multi_reduction <add>, %15, %cst_5 [1] : vector<8x4xf32> to vector<8xf32>
    %17 = vector.shape_cast %16 : vector<8xf32> to vector<8x1xf32>
    %18 = arith.subf %9, %17 : vector<8x1xf32>
    %c0_6 = arith.constant 0 : index
    %c0_7 = arith.constant 0 : index
    %19 = vector.load %arg3[%c0_6, %c0_7] : memref<8x1xf32, #tpu.memory_space<vmem>>, vector<8x1xf32>
    tpu.vector_store %arg3[%c0_6, %c0_7], %18 {strides = array<i32>} : memref<8x1xf32, #tpu.memory_space<vmem>>, vector<8x1xf32>,
    return
  }
  func.func @transform_0(%arg0: i32) -> (i32, i32) {
    %c0_i32 = arith.constant 0 : i32
    %c0_i32_0 = arith.constant 0 : i32
    return %arg0, %c0_i32 : i32, i32
  }
  func.func @transform_1(%arg0: i32) -> (i32, i32) {
    %c0_i32 = arith.constant 0 : i32
    %c0_i32_0 = arith.constant 0 : i32
    return %arg0, %c0_i32 : i32, i32
  }
  func.func @transform_2(%arg0: i32) -> (i32, i32) {
    %c0_i32 = arith.constant 0 : i32
    %c0_i32_0 = arith.constant 0 : i32
    return %arg0, %c0_i32 : i32, i32
  }
}

</mosaic_0001>

<llo_original>
// kernel: tpu_custom_call.1
$region0: #{tpu_custom_call.1}
  #allocation0 [shape = 'u32[]', space=smem, size = 0x4, offset = 0x4, fixed_abs, tag = 'smem constant byte address 0x4 - core index']
  #allocation1 [shape = 'u32[144,128]{1,0:T(1,128)}', space=vmem, size = 0x12000, scoped, tag = 'internal scratch']
  %s0 = inlined_call_operand.vmem [shape: f32[8,4], index: 0, kind: input, shape index: {}]
  %s1 = inlined_call_operand.vmem [shape: s32[8,1], index: 1, kind: input, shape index: {}]
  %s2 = inlined_call_operand.vmem [shape: f32[8,1], index: 2, kind: output, shape index: {}]
  %s3 = sld [smem:[#allocation0]]
  $region18: #{tpu_custom_call.1} parent=0
    _
  %s5 = ssub.s32 1, %s3
  %s6 = scalar_select 0, %s5, %s3
  // Predicated region
  $region2: #{tpu_custom_call.1} parent=0 // pred_check
    _
  $region3: #{tpu_custom_call.1} parent=0 // pred_check_branch
    %8 = sbr.rel (0) target = $region5
  $region4: #{tpu_custom_call.1} parent=0 // pred_region
    _
  $region5: #{tpu_custom_call.1} parent=0 // pred_fallthru
    _
  // Predicated region
  $region6: #{tpu_custom_call.1} parent=0 // pred_check
    _
  $region7: #{tpu_custom_call.1} parent=0 // pred_check_branch
    %10 = sbr.rel (0) target = $region9
  $region8: #{tpu_custom_call.1} parent=0 // pred_region
    _
  $region9: #{tpu_custom_call.1} parent=0 // pred_fallthru
    _
  %v11 = vld [vmem:[%s0] sm:$0xff]
  %vm12 = vcmask 31744
  %v13 = vsel %vm12, %v11, -inf
  %14 = vmax.xlane.f32.xlu0 %v13
  %v15 = vpop.xlane.xlu0 %14
  %v16 = vsub.f32 %v11, %v15
  %v17 = vmul.f32 %v16, 1.442695
  %v18 = vpow.pop %v17
  %v19 = vsel %vm12, %v18, 0.0
  %20 = vadd.xlane.f32.xlu0 %v19
  %v21 = vpop.xlane.xlu0 %20
  %v22 = vlog2.pop %v21
  %v23 = vmul.f32 %v22, 0.6931472
  %v24 = vadd.f32 %v23, %v15
  %v25 = vlaneseq
  %v26 = vand.u32 %v25, 127
  %v27 = vld [vmem:[%s1] sm:$0xff]
  %28 = vset.pattern.permute.xlu0 0
  %29 = vperm.xlu0 %28, %v27
  %v30 = vpop.permute.xlu0 %29
  %vm31 = vcmp.eq.s32.totalorder %v26, %v30
  %v32 = vsel %vm31, %v11, 0.0
  %v33 = vsel %vm12, %v32, 0.0
  %34 = vadd.xlane.f32.xlu0 %v33
  %v35 = vpop.xlane.xlu0 %34
  %v36 = vsub.f32 %v24, %v35
  %vm37 = vcmask 7168
  %38 = vst.msk [vmem:[%s2] sm:$0xff] %vm37, %v36
  // Predicated region
  $region10: #{tpu_custom_call.1} parent=0 // pred_check
    _
  $region11: #{tpu_custom_call.1} parent=0 // pred_check_branch
    %40 = sbr.rel (0) target = $region13
  $region12: #{tpu_custom_call.1} parent=0 // pred_region
    _
  $region13: #{tpu_custom_call.1} parent=0 // pred_fallthru
    _
  // Predicated region
  $region14: #{tpu_custom_call.1} parent=0 // pred_check
    _
  $region15: #{tpu_custom_call.1} parent=0 // pred_check_branch
    %42 = sbr.rel (0) target = $region17
  $region16: #{tpu_custom_call.1} parent=0 // pred_region
    _
  $region17: #{tpu_custom_call.1} parent=0 // pred_fallthru
    _

</llo_original>
